<compile_context>
chip_gen: v5e
topology: v5e:2x2
jax: 0.10.0
libtpu: 0.0.40
codegen_flags: <defaults>
</compile_context>

<pallas_src>
import jax
import jax.numpy as jnp
from jax import lax
from jax.experimental import pallas as pl
from jax.experimental.pallas import tpu as pltpu


def _round_up(x, m):
    return ((x + m - 1) // m) * m


# -----------------------------------------------------------------------------
# Kernels
# -----------------------------------------------------------------------------

def _head_kernel_fused(x_ref, w_ref, b_ref, o_ref):
    """Single K pass: whole contraction dim resident in VMEM per M tile.

    x_ref: [tm, K_pad]; w_ref: [K_pad, tn] (MXU-native [K, N] layout);
    b_ref: [1, tn] f32; o_ref: [tm, tn].
    """
    lhs = x_ref[...]
    if lhs.dtype != w_ref.dtype:            # stream W as bf16, cast X on the VPU
        lhs = lhs.astype(w_ref.dtype)
    acc = jnp.dot(lhs, w_ref[...], preferred_element_type=jnp.float32)
    o_ref[...] = (acc + b_ref[...]).astype(o_ref.dtype)


def _head_kernel_ksplit(x_ref, w_ref, b_ref, o_ref, acc_ref):
    """K-reduction fallback for when resident W does not fit VMEM."""
    @pl.when(pl.program_id(2) == 0)
    def _init():
        acc_ref[...] = jnp.zeros_like(acc_ref)

    lhs = x_ref[...]
    if lhs.dtype != w_ref.dtype:
        lhs = lhs.astype(w_ref.dtype)
    acc_ref[...] += jnp.dot(lhs, w_ref[...], preferred_element_type=jnp.float32)

    @pl.when(pl.program_id(2) == pl.num_programs(2) - 1)
    def _finalize():
        o_ref[...] = (acc_ref[...] + b_ref[...]).astype(o_ref.dtype)


# -----------------------------------------------------------------------------
# One-time (model-load) parameter preparation
# -----------------------------------------------------------------------------

def prepare_forecasting_head_params(weight, bias, *, weight_dtype=jnp.bfloat16,
                                     lane_multiple=128, k_multiple=256):
    """Transpose / zero-pad / cast the nn.Linear params once, at model-load time.

    weight: [horizon, head_nf] (PyTorch nn.Linear layout); bias: [horizon].
    Returns (w_t [K_pad, N_pad] weight_dtype, b2d [1, N_pad] f32, horizon, head_nf).
    Zero padding is numerically exact.
    """
    horizon, head_nf = weight.shape
    assert bias.shape == (horizon,)
    n_pad = _round_up(horizon, lane_multiple)
    k_pad = _round_up(head_nf, k_multiple)
    w_t = jnp.transpose(weight).astype(weight_dtype)                     # [K, N]
    w_t = jnp.pad(w_t, ((0, k_pad - head_nf), (0, n_pad - horizon)))
    b2d = jnp.pad(bias.astype(jnp.float32), (0, n_pad - horizon)).reshape(1, n_pad)
    return w_t, b2d, horizon, head_nf


# -----------------------------------------------------------------------------
# Hardware-aware helpers
# -----------------------------------------------------------------------------

def _vmem_budget_bytes():
    """Generation-aware scoped-VMEM budget, with headroom for compiler scratch."""
    cap = 64 << 20                      # conservative default (v7x per-TC VMEM)
    try:
        info = pltpu.get_tpu_info()
        cap = int(getattr(info, "vmem_capacity_bytes", cap))
    except Exception:
        pass
    return int(cap * 0.85)              # ~54 MiB on v7x, ~108 MiB on v5e/v6e


def _has_multiple_tensorcores():
    """True on chips with >1 TensorCore per chip (v4 / v5p megacore, v7x)."""
    try:
        kind = jax.devices()[0].device_kind.lower()
        return ("7" in kind) or ("v4" in kind) or ("v5p" in kind)
    except Exception:
        return False


# -----------------------------------------------------------------------------
# Forward wrapper
# -----------------------------------------------------------------------------

def forecasting_head(x, w_t, b2d, horizon, head_nf, *,
                     tile_m=256, tile_k=2048,
                     force_k_split=False, vmem_budget_bytes=None):
    """ForecastingHead forward: flatten(-2) + Linear (+ eval-mode dropout = id).

    x:   [B, C, d_model, n_patches] with d_model * n_patches == head_nf
    w_t: [K_pad, N_pad] prepared weight (see prepare_forecasting_head_params)
    b2d: [1, N_pad]    prepared bias
    returns [B, C, horizon]
    """
    B, C, d_model, n_patches = x.shape
    assert d_model * n_patches == head_nf
    K_pad, N_pad = w_t.shape
    assert K_pad >= head_nf and N_pad >= horizon

    M = B * C
    # Row-major flatten of the last two dims == torch.nn.Flatten(start_dim=-2).
    x2d = x.reshape(M, head_nf)
    if K_pad != head_nf:
        # Rare (head_nf not a multiple of 256); zero-pad K, numerically exact.
        x2d = jnp.pad(x2d, ((0, 0), (0, K_pad - head_nf)))

    x_sz = x2d.dtype.itemsize
    w_sz = w_t.dtype.itemsize
    o_sz = x.dtype.itemsize

    budget = _vmem_budget_bytes() if vmem_budget_bytes is None else int(vmem_budget_bytes)
    margin = 4 << 20

    def fused_need(tm, tn, w_bufs):
        return (w_bufs * K_pad * tn * w_sz      # resident weight
                + 2 * tn * 4                    # bias
                + 2 * tm * K_pad * x_sz         # double-buffered X tile
                + 2 * tm * tn * o_sz            # double-buffered out tile
                + tm * tn * 4)                  # f32 dot result before cast

    # M tile choice. No activation padding: the ragged last block is fine,
    # rows past M are dropped on writeback.
    tm = None
    if not force_k_split:
        cands = [M] if M <= tile_m else [tile_m, max(128, tile_m // 2)]
        for cand in cands:
            if fused_need(cand, N_pad, 1) + margin <= budget:
                tm = cand
                break

    flops = 2 * M * K_pad * N_pad
    bytes_accessed = (M * K_pad * x_sz + K_pad * N_pad * w_sz
                      + N_pad * 4 + M * N_pad * o_sz)
    cost = pl.CostEstimate(flops=flops, transcendentals=0,
                           bytes_accessed=bytes_accessed)

    if tm is not None:
        # ---------------- fused single-K-pass path ----------------
        grid_m = pl.cdiv(M, tm)
        grid_n, tn = 1, N_pad
        # Weight-HBM-bound small-batch case on a multi-TC chip: split the
        # weight columns across cores so both HBM paths stream W.
        if grid_m == 1 and N_pad >= 256 and _has_multiple_tensorcores():
            if (N_pad // 2) % 128 == 0:
                grid_n, tn = 2, N_pad // 2

        # Limit sized for the worst case (double-buffered W) so the no-Buffered
        # fallback still fits; clamped to the generation-aware budget.
        vmem_limit = int(min(max(fused_need(tm, tn, 2) + margin, 16 << 20), budget))

        def run(single_buffer_w):
            if single_buffer_w:
                w_spec = pl.BlockSpec((K_pad, tn), lambda i, j: (0, j),
                                      pipeline_mode=pl.Buffered(1))
                b_spec = pl.BlockSpec((1, tn), lambda i, j: (0, j),
                                      pipeline_mode=pl.Buffered(1))
            else:
                w_spec = pl.BlockSpec((K_pad, tn), lambda i, j: (0, j))
                b_spec = pl.BlockSpec((1, tn), lambda i, j: (0, j))
            return pl.pallas_call(
                _head_kernel_fused,
                out_shape=jax.ShapeDtypeStruct((M, N_pad), x.dtype),
                grid=(grid_m, grid_n),
                in_specs=[
                    pl.BlockSpec((tm, K_pad), lambda i, j: (i, 0)),
                    w_spec,
                    b_spec,
                ],
                out_specs=pl.BlockSpec((tm, tn), lambda i, j: (i, j)),
                compiler_params=pltpu.CompilerParams(
                    dimension_semantics=("parallel", "parallel"),
                    vmem_limit_bytes=vmem_limit,
                ),
                cost_estimate=cost,
            )(x2d, w_t, b2d)

        try:
            out = run(True)      # single-buffer the grid-invariant W / bias
        except Exception:
            out = run(False)     # fall back if Buffered(1) is not supported
    else:
        # ---------------- K-reduction fallback ----------------
        tm = M if M <= tile_m else tile_m
        tn = N_pad
        for cand_tn in (512, 256, 128):
            if N_pad % cand_tn == 0:
                tn = min(N_pad, cand_tn)
                break
        # tk must divide K_pad exactly (garbage in a ragged K tail would
        # corrupt the accumulation); K_pad is a multiple of 256 by construction.
        if K_pad % 128 == 0:
            n128 = K_pad // 128
            tk = 128
            for d in range(n128, 0, -1):
                cand = 128 * d
                if cand <= tile_k and n128 % d == 0:
                    tk = cand
                    break
        else:
            tk = K_pad
        grid_m = pl.cdiv(M, tm)
        grid_n = N_pad // tn
        grid_k = K_pad // tk

        need = (2 * tm * tk * x_sz + 2 * tk * tn * w_sz + 2 * tn * 4
                + 2 * tm * tn * o_sz + tm * tn * 4)
        vmem_limit = int(min(max(need + margin, 16 << 20), budget))

        out = pl.pallas_call(
            _head_kernel_ksplit,
            out_shape=jax.ShapeDtypeStruct((M, N_pad), x.dtype),
            grid=(grid_m, grid_n, grid_k),
            in_specs=[
                pl.BlockSpec((tm, tk), lambda i, j, k: (i, k)),
                pl.BlockSpec((tk, tn), lambda i, j, k: (k, j)),
                pl.BlockSpec((1, tn), lambda i, j, k: (0, j)),
            ],
            out_specs=pl.BlockSpec((tm, tn), lambda i, j, k: (i, j)),
            scratch_shapes=[pltpu.VMEM((tm, tn), jnp.float32)],
            compiler_params=pltpu.CompilerParams(
                dimension_semantics=("parallel", "parallel", "arbitrary"),
                vmem_limit_bytes=vmem_limit,
            ),
            cost_estimate=cost,
        )(x2d, w_t, b2d)

    # TODO(synk): nn.Dropout is identity in eval mode; train-mode stochastic
    # dropout is not implemented in this kernel.
    return out[:, :horizon].reshape(B, C, horizon)


# -----------------------------------------------------------------------------
# Self-test
# -----------------------------------------------------------------------------

if __name__ == "__main__":
    # Small shapes consistent with the module's forward:
    # batch=2, channels=4, d_model=32, n_patches=8 -> head_nf=256, horizon=96.
    B, C, d_model, n_patches = 2, 4, 32, 8
    head_nf = d_model * n_patches
    horizon = 96

    key = jax.random.PRNGKey(0)
    kx, kw, kb = jax.random.split(key, 3)
    x = jax.random.normal(kx, (B, C, d_model, n_patches), dtype=jnp.float32)
    bound = 1.0 / (head_nf ** 0.5)
    weight = jax.random.uniform(kw, (horizon, head_nf), minval=-bound,
                                maxval=bound, dtype=jnp.float32)
    bias = jax.random.uniform(kb, (horizon,), minval=-bound, maxval=bound,
                              dtype=jnp.float32)

    # One-time (model-load) weight prep: transpose to [K, N], zero-pad, bf16.
    w_t, b2d, N, K = prepare_forecasting_head_params(weight, bias)

    # Fused single-pass path.
    y = forecasting_head(x, w_t, b2d, N, K)
    jax.block_until_ready(y)
    assert y.shape == (B, C, horizon)

    # Reference with the same bf16 quantization the kernel applies to x and W.
    xq = x.reshape(B, C, head_nf).astype(jnp.bfloat16).astype(jnp.float32)
    wq = weight.astype(jnp.bfloat16).astype(jnp.float32)
    y_ref_bf16 = jnp.einsum("bck,nk->bcn", xq, wq,
                            precision=lax.Precision.HIGHEST) + bias
    assert jnp.allclose(y, y_ref_bf16, atol=2e-3, rtol=2e-3), "fused path mismatch"

    # Loose sanity check against the exact f32 PyTorch-equivalent forward.
    y_ref_f32 = jnp.einsum("bck,nk->bcn", x.reshape(B, C, head_nf), weight,
                           precision=lax.Precision.HIGHEST) + bias
    assert jnp.allclose(y, y_ref_f32, atol=3e-2, rtol=3e-2), "fp32 sanity mismatch"

    # Exercise the K-reduction fallback path on the same small problem.
    y_ks = forecasting_head(x, w_t, b2d, N, K, force_k_split=True, tile_k=128)
    jax.block_until_ready(y_ks)
    assert jnp.allclose(y_ks, y_ref_bf16, atol=2e-3, rtol=2e-3), "k-split mismatch"

    print("KERNEL_OK")
</pallas_src>

<mosaic_0001>
module attributes {stable_mosaic.version = 11 : i64} {
  func.func @_head_kernel_fused(%arg0: i32, %arg1: i32, %arg2: memref<8x256xf32, #tpu.memory_space<vmem>>, %arg3: memref<256x128xbf16, #tpu.memory_space<vmem>>, %arg4: memref<1x128xf32, #tpu.memory_space<vmem>>, %arg5: memref<8x128xf32, #tpu.memory_space<vmem>>) attributes {dimension_semantics = [#tpu.dimension_semantics<parallel>, #tpu.dimension_semantics<parallel>], iteration_bounds = array<i64: 1, 1>, scalar_prefetch = 0 : i64, scratch_operands = 0 : i64, tpu.core_type = #tpu.core_type<tc>, window_params = [{transform_indices = @transform_0, window_bounds = array<i64: 8, 256>}, {pipeline_mode = #tpu.pipeline_mode<synchronous>, transform_indices = @transform_1, window_bounds = array<i64: 256, 128>}, {pipeline_mode = #tpu.pipeline_mode<synchronous>, transform_indices = @transform_2, window_bounds = array<i64: 1, 128>}, {transform_indices = @transform_3, window_bounds = array<i64: 8, 128>}]} {
    %c0 = arith.constant 0 : index
    %c0_0 = arith.constant 0 : index
    %0 = vector.load %arg2[%c0, %c0_0] : memref<8x256xf32, #tpu.memory_space<vmem>>, vector<8x256xf32>
    %1 = arith.truncf %0 : vector<8x256xf32> to vector<8x256xbf16>
    %c0_1 = arith.constant 0 : index
    %c0_2 = arith.constant 0 : index
    %2 = vector.load %arg3[%c0_1, %c0_2] : memref<256x128xbf16, #tpu.memory_space<vmem>>, vector<256x128xbf16>
    %cst = arith.constant dense<0.000000e+00> : vector<8x128xf32>
    %3 = tpu.matmul %1, %2, %cst {dimension_numbers = #tpu.dot_dimension_numbers<[1], [0], [0], [1], [0, 0, 1, 1], [], []>} : vector<8x256xbf16>, vector<256x128xbf16>, vector<8x128xf32> -> vector<8x128xf32>
    %c0_3 = arith.constant 0 : index
    %c0_4 = arith.constant 0 : index
    %4 = vector.load %arg4[%c0_3, %c0_4] : memref<1x128xf32, #tpu.memory_space<vmem>>, vector<1x128xf32>
    %5 = vector.broadcast %4 : vector<1x128xf32> to vector<8x128xf32>
    %6 = arith.addf %3, %5 : vector<8x128xf32>
    %c0_5 = arith.constant 0 : index
    %c0_6 = arith.constant 0 : index
    %7 = vector.load %arg5[%c0_5, %c0_6] : memref<8x128xf32, #tpu.memory_space<vmem>>, vector<8x128xf32>
    tpu.vector_store %arg5[%c0_5, %c0_6], %6 {strides = array<i32>} : memref<8x128xf32, #tpu.memory_space<vmem>>, vector<8x128xf32>,
    return
  }
  func.func @transform_0(%arg0: i32, %arg1: i32) -> (i32, i32) {
    %c0_i32 = arith.constant 0 : i32
    %c0_i32_0 = arith.constant 0 : i32
    return %arg0, %c0_i32 : i32, i32
  }
  func.func @transform_1(%arg0: i32, %arg1: i32) -> (i32, i32) {
    %c0_i32 = arith.constant 0 : i32
    %c0_i32_0 = arith.constant 0 : i32
    return %c0_i32, %arg1 : i32, i32
  }
  func.func @transform_2(%arg0: i32, %arg1: i32) -> (i32, i32) {
    %c0_i32 = arith.constant 0 : i32
    %c0_i32_0 = arith.constant 0 : i32
    return %c0_i32, %arg1 : i32, i32
  }
  func.func @transform_3(%arg0: i32, %arg1: i32) -> (i32, i32) {
    %c0_i32 = arith.constant 0 : i32
    return %arg0, %arg1 : i32, i32
  }
}

module attributes {stable_mosaic.version = 11 : i64} {
  func.func @_head_kernel_fused(%arg0: i32, %arg1: i32, %arg2: memref<8x256xf32, #tpu.memory_space<vmem>>, %arg3: memref<256x128xbf16, #tpu.memory_space<vmem>>, %arg4: memref<1x128xf32, #tpu.memory_space<vmem>>, %arg5: memref<8x128xf32, #tpu.memory_space<vmem>>) attributes {dimension_semantics = [#tpu.dimension_semantics<parallel>, #tpu.dimension_semantics<parallel>], iteration_bounds = array<i64: 1, 1>, scalar_prefetch = 0 : i64, scratch_operands = 0 : i64, tpu.core_type = #tpu.core_type<tc>, window_params = [{transform_indices = @transform_0, window_bounds = array<i64: 8, 256>}, {transform_indices = @transform_1, window_bounds = array<i64: 256, 128>}, {transform_indices = @transform_2, window_bounds = array<i64: 1, 128>}, {transform_indices = @transform_3, window_bounds = array<i64: 8, 128>}]} {
    %c0 = arith.constant 0 : index
    %c0_0 = arith.constant 0 : index
    %0 = vector.load %arg2[%c0, %c0_0] : memref<8x256xf32, #tpu.memory_space<vmem>>, vector<8x256xf32>
    %1 = arith.truncf %0 : vector<8x256xf32> to vector<8x256xbf16>
    %c0_1 = arith.constant 0 : index
    %c0_2 = arith.constant 0 : index
    %2 = vector.load %arg3[%c0_1, %c0_2] : memref<256x128xbf16, #tpu.memory_space<vmem>>, vector<256x128xbf16>
    %cst = arith.constant dense<0.000000e+00> : vector<8x128xf32>
    %3 = tpu.matmul %1, %2, %cst {dimension_numbers = #tpu.dot_dimension_numbers<[1], [0], [0], [1], [0, 0, 1, 1], [], []>} : vector<8x256xbf16>, vector<256x128xbf16>, vector<8x128xf32> -> vector<8x128xf32>
    %c0_3 = arith.constant 0 : index
    %c0_4 = arith.constant 0 : index
    %4 = vector.load %arg4[%c0_3, %c0_4] : memref<1x128xf32, #tpu.memory_space<vmem>>, vector<1x128xf32>
    %5 = vector.broadcast %4 : vector<1x128xf32> to vector<8x128xf32>
    %6 = arith.addf %3, %5 : vector<8x128xf32>
    %c0_5 = arith.constant 0 : index
    %c0_6 = arith.constant 0 : index
    %7 = vector.load %arg5[%c0_5, %c0_6] : memref<8x128xf32, #tpu.memory_space<vmem>>, vector<8x128xf32>
    tpu.vector_store %arg5[%c0_5, %c0_6], %6 {strides = array<i32>} : memref<8x128xf32, #tpu.memory_space<vmem>>, vector<8x128xf32>,
    return
  }
  func.func @transform_0(%arg0: i32, %arg1: i32) -> (i32, i32) {
    %c0_i32 = arith.constant 0 : i32
    %c0_i32_0 = arith.constant 0 : i32
    return %arg0, %c0_i32 : i32, i32
  }
  func.func @transform_1(%arg0: i32, %arg1: i32) -> (i32, i32) {
    %c0_i32 = arith.constant 0 : i32
    %c0_i32_0 = arith.constant 0 : i32
    return %c0_i32, %arg1 : i32, i32
  }
  func.func @transform_2(%arg0: i32, %arg1: i32) -> (i32, i32) {
    %c0_i32 = arith.constant 0 : i32
    %c0_i32_0 = arith.constant 0 : i32
    return %c0_i32, %arg1 : i32, i32
  }
  func.func @transform_3(%arg0: i32, %arg1: i32) -> (i32, i32) {
    %c0_i32 = arith.constant 0 : i32
    return %arg0, %arg1 : i32, i32
  }
}

</mosaic_0001>

<llo_original>
// kernel: tpu_custom_call.1
$region0: #{tpu_custom_call.1}
  #allocation0 [shape = 'u32[]', space=smem, size = 0x4, offset = 0x4, fixed_abs, tag = 'smem constant byte address 0x4 - core index']
  #allocation1 [shape = 'u32[72,128]{1,0:T(1,128)}', space=vmem, size = 0x9000, scoped, tag = 'internal scratch']
  %s0 = inlined_call_operand.hbm [shape: f32[8,256], index: 0, kind: input, shape index: {}]
  %s1 = inlined_call_operand.hbm [shape: bf16[256,128], index: 1, kind: input, shape index: {}]
  %s2 = inlined_call_operand.vmem [shape: f32[1,128], index: 2, kind: input, shape index: {}]
  %s3 = inlined_call_operand.hbm [shape: f32[8,128], index: 3, kind: output, shape index: {}]
  %s4 = sld [smem:[#allocation0]]
  $region30: #{tpu_custom_call.1} parent=0
    _
  %s6 = ssub.s32 1, %s4
  %s7 = scalar_select 0, %s6, %s4
  $region1: #{tpu_custom_call.1} parent=0
    #allocation2 [shape = 'u8[8192]{0}', space=vmem, size = 0x2000, scoped, tag = 'input window, operand 0, single buffered']
    #allocation3 [shape = 's32[1]{0}', space=sflag, size = 0x4, scoped, tag = 'scoped memory for tpu_custom_call.1']
    #allocation4 [shape = 's32[1]{0}', space=sflag, size = 0x4, scoped, tag = 'scoped memory for tpu_custom_call.1']
    #allocation5 [shape = 'u8[65536]{0}', space=vmem, size = 0x10000, scoped, tag = 'input window, operand 1, single buffered']
    #allocation6 [shape = 's32[1]{0}', space=sflag, size = 0x4, scoped, tag = 'scoped memory for tpu_custom_call.1']
    #allocation7 [shape = 'u8[4096]{0}', space=vmem, size = 0x1000, scoped, tag = 'output window, operand 0, single buffered']
    %8 = vsyncpa [#allocation3], 0
    %9 = vsyncpa [#allocation6], 0
    %10 = vsyncpa [#allocation4], 0
    // Predicated region
    $region2: #{tpu_custom_call.1} parent=1 // pred_check
      _
    $region3: #{tpu_custom_call.1} parent=1 // pred_check_branch
      %12 = sbr.rel (0) target = $region5
    $region4: #{tpu_custom_call.1} parent=1 // pred_region
      %14 = vsyncadd [#allocation3], 0
      %s16 = sshll.u32 %s0, 4
      %s17 = int_to_ptr.hbm [resolvable:$true] %s16
      %s18 = sshll.u32 [#allocation2], 4
      %s19 = int_to_ptr.vmem [resolvable:$true] %s18
      %21 = dma.hbm_to_vmem [thread:$0]  %s17, 256, %s19, [#allocation3]
    $region5: #{tpu_custom_call.1} parent=1 // pred_fallthru
      _
    // Predicated region
    $region6: #{tpu_custom_call.1} parent=1 // pred_check
      _
    $region7: #{tpu_custom_call.1} parent=1 // pred_check_branch
      %23 = sbr.rel (0) target = $region9
    $region8: #{tpu_custom_call.1} parent=1 // pred_region
      %25 = vsyncadd [#allocation6], 0
      %s26 = sshll.u32 %s1, 4
      %s27 = int_to_ptr.hbm [resolvable:$true] %s26
      %s28 = sshll.u32 [#allocation5], 4
      %s29 = int_to_ptr.vmem [resolvable:$true] %s28
      %34 = dma.hbm_to_vmem [thread:$0]  %s27, 2048, %s29, [#allocation6], 64, 64, 4
    $region9: #{tpu_custom_call.1} parent=1 // pred_fallthru
      _
    // Predicated region
    $region10: #{tpu_custom_call.1} parent=1 // pred_check
      _
    $region11: #{tpu_custom_call.1} parent=1 // pred_check_branch
      %36 = sbr.rel (0) target = $region13
    $region12: #{tpu_custom_call.1} parent=1 // pred_region
      _
    $region13: #{tpu_custom_call.1} parent=1 // pred_fallthru
      _
    // Predicated region
    $region14: #{tpu_custom_call.1} parent=1 // pred_check
      _
    $region15: #{tpu_custom_call.1} parent=1 // pred_check_branch
      %38 = sbr.rel (0) target = $region17
    $region16: #{tpu_custom_call.1} parent=1 // pred_region
      %40 = dma.done [#allocation3], 256
    $region17: #{tpu_custom_call.1} parent=1 // pred_fallthru
      _
    // Predicated region
    $region18: #{tpu_custom_call.1} parent=1 // pred_check
      _
    $region19: #{tpu_custom_call.1} parent=1 // pred_check_branch
      %42 = sbr.rel (0) target = $region21
    $region20: #{tpu_custom_call.1} parent=1 // pred_region
      %44 = dma.done [#allocation6], 2048
    $region21: #{tpu_custom_call.1} parent=1 // pred_fallthru
      _
    %v45 = vld [vmem:[#allocation2] sm:$0xff]
    %v46 = vld [vmem:[#allocation2 + $0x8] sm:$0xff]
    %v47 = vpack.c.bf16 %v45, %v45
    %v48 = vpack.c.bf16 %v46, %v46
    %v49 = vld [vmem:[#allocation5] sm:$0xf]
    %v50 = vld [vmem:[#allocation5 + $0x4] sm:$0xf]
    %v51 = vld [vmem:[#allocation5 + $0x8] sm:$0xf]
    %v52 = vld [vmem:[#allocation5 + $0xc] sm:$0xf]
    %v53 = vld [vmem:[#allocation5 + $0x10] sm:$0xf]
    %v54 = vld [vmem:[#allocation5 + $0x14] sm:$0xf]
    %v55 = vld [vmem:[#allocation5 + $0x18] sm:$0xf]
    %v56 = vld [vmem:[#allocation5 + $0x1c] sm:$0xf]
    %v57 = vld [vmem:[#allocation5 + $0x20] sm:$0xf]
    %v58 = vld [vmem:[#allocation5 + $0x24] sm:$0xf]
    %v59 = vld [vmem:[#allocation5 + $0x28] sm:$0xf]
    %v60 = vld [vmem:[#allocation5 + $0x2c] sm:$0xf]
    %v61 = vld [vmem:[#allocation5 + $0x30] sm:$0xf]
    %v62 = vld [vmem:[#allocation5 + $0x34] sm:$0xf]
    %v63 = vld [vmem:[#allocation5 + $0x38] sm:$0xf]
    %v64 = vld [vmem:[#allocation5 + $0x3c] sm:$0xf]
    %v65 = vld [vmem:[#allocation5 + $0x40] sm:$0xf]
    %v66 = vld [vmem:[#allocation5 + $0x44] sm:$0xf]
    %v67 = vld [vmem:[#allocation5 + $0x48] sm:$0xf]
    %v68 = vld [vmem:[#allocation5 + $0x4c] sm:$0xf]
    %v69 = vld [vmem:[#allocation5 + $0x50] sm:$0xf]
    %v70 = vld [vmem:[#allocation5 + $0x54] sm:$0xf]
    %v71 = vld [vmem:[#allocation5 + $0x58] sm:$0xf]
    %v72 = vld [vmem:[#allocation5 + $0x5c] sm:$0xf]
    %v73 = vld [vmem:[#allocation5 + $0x60] sm:$0xf]
    %v74 = vld [vmem:[#allocation5 + $0x64] sm:$0xf]
    %v75 = vld [vmem:[#allocation5 + $0x68] sm:$0xf]
    %v76 = vld [vmem:[#allocation5 + $0x6c] sm:$0xf]
    %v77 = vld [vmem:[#allocation5 + $0x70] sm:$0xf]
    %v78 = vld [vmem:[#allocation5 + $0x74] sm:$0xf]
    %v79 = vld [vmem:[#allocation5 + $0x78] sm:$0xf]
    %v80 = vld [vmem:[#allocation5 + $0x7c] sm:$0xf]
    %v81 = vld [vmem:[%s2] sm:$0x1]
    %v83 = vperm.slane %v81, 0
    %v117 = vunpack.c.l.b16 %v49
    %v118 = vunpack.c.l.b16 %v50
    %v119 = vunpack.c.l.b16 %v51
    %v120 = vunpack.c.l.b16 %v52
    %v121 = vunpack.c.l.b16 %v53
    %v122 = vunpack.c.l.b16 %v54
    %v123 = vunpack.c.l.b16 %v55
    %v124 = vunpack.c.l.b16 %v56
    %v125 = vunpack.c.l.b16 %v57
    %v126 = vunpack.c.l.b16 %v58
    %v127 = vunpack.c.l.b16 %v59
    %v128 = vunpack.c.l.b16 %v60
    %v129 = vunpack.c.l.b16 %v61
    %v130 = vunpack.c.l.b16 %v62
    %v131 = vunpack.c.l.b16 %v63
    %v132 = vunpack.c.l.b16 %v64
    %v133 = vunpack.c.l.b16 %v65
    %v134 = vunpack.c.l.b16 %v66
    %v135 = vunpack.c.l.b16 %v67
    %v136 = vunpack.c.l.b16 %v68
    %v137 = vunpack.c.l.b16 %v69
    %v138 = vunpack.c.l.b16 %v70
    %v139 = vunpack.c.l.b16 %v71
    %v140 = vunpack.c.l.b16 %v72
    %v141 = vunpack.c.l.b16 %v73
    %v142 = vunpack.c.l.b16 %v74
    %v143 = vunpack.c.l.b16 %v75
    %v144 = vunpack.c.l.b16 %v76
    %v145 = vunpack.c.l.b16 %v77
    %v146 = vunpack.c.l.b16 %v78
    %v147 = vunpack.c.l.b16 %v79
    %v148 = vunpack.c.l.b16 %v80
    %v149 = vpack.c.b16 %v118, %v117
    %v150 = vpack.c.b16 %v120, %v119
    %v151 = vpack.c.b16 %v122, %v121
    %v152 = vpack.c.b16 %v124, %v123
    %v153 = vpack.c.b16 %v126, %v125
    %v154 = vpack.c.b16 %v128, %v127
    %v155 = vpack.c.b16 %v130, %v129
    %v156 = vpack.c.b16 %v132, %v131
    %v157 = vpack.c.b16 %v134, %v133
    %v158 = vpack.c.b16 %v136, %v135
    %v159 = vpack.c.b16 %v138, %v137
    %v160 = vpack.c.b16 %v140, %v139
    %v161 = vpack.c.b16 %v142, %v141
    %v162 = vpack.c.b16 %v144, %v143
    %v163 = vpack.c.b16 %v146, %v145
    %v164 = vpack.c.b16 %v148, %v147
    %181 = vmatpush.bf16.msra.mxu0 %v156
    %182 = vmatpush.bf16.msra.mxu0 %v155
    %183 = vmatpush.bf16.msra.mxu0 %v154
    %184 = vmatpush.bf16.msra.mxu0 %v153
    %185 = vmatpush.bf16.msra.mxu0 %v152
    %186 = vmatpush.bf16.msra.mxu0 %v151
    %187 = vmatpush.bf16.msra.mxu0 %v150
    %188 = vmatpush.bf16.msra.mxu0 %v149
    %189 = vmatmul.bf16.gmra.mxu0 %v47
    %v190 = vpop.f32.mrf.mxu0
    %v191 = vadd.f32 %v83, %v190
    %v192 = vpop.f32.mrf.mxu0
    %193 = vdwg.mxu0
    %194 = vmatpush.bf16.msra.mxu0 %v164
    %195 = vmatpush.bf16.msra.mxu0 %v163
    %196 = vmatpush.bf16.msra.mxu0 %v162
    %197 = vmatpush.bf16.msra.mxu0 %v161
    %198 = vmatpush.bf16.msra.mxu0 %v160
    %199 = vmatpush.bf16.msra.mxu0 %v159
    %200 = vmatpush.bf16.msra.mxu0 %v158
    %201 = vmatpush.bf16.msra.mxu0 %v157
    %202 = vmatmul.bf16.gmra.mxu0 %v48
    %v203 = vpop.f32.mrf.mxu0
    %v204 = vadd.f32 %v191, %v203
    %v205 = vpop.f32.mrf.mxu0
    %206 = vdwg.mxu0
    %207 = vst [vmem:[#allocation7] sm:$0xff] %v204
    // Predicated region
    $region22: #{tpu_custom_call.1} parent=1 // pred_check
      _
    $region23: #{tpu_custom_call.1} parent=1 // pred_check_branch
      %209 = sbr.rel (0) target = $region25
    $region24: #{tpu_custom_call.1} parent=1 // pred_region
      %211 = vsyncadd [#allocation4], 0
      %s213 = sshll.u32 [#allocation7], 4
      %s214 = int_to_ptr.vmem [resolvable:$true] %s213
      %s215 = sshll.u32 %s3, 4
      %s216 = int_to_ptr.hbm [resolvable:$true] %s215
      %218 = dma.vmem_to_hbm [thread:$0]  %s214, 128, %s216, [#allocation4]
    $region25: #{tpu_custom_call.1} parent=1 // pred_fallthru
      _
    // Predicated region
    $region26: #{tpu_custom_call.1} parent=1 // pred_check
      _
    $region27: #{tpu_custom_call.1} parent=1 // pred_check_branch
      %220 = sbr.rel (0) target = $region29
    $region28: #{tpu_custom_call.1} parent=1 // pred_region
      %222 = dma.done [#allocation4], 128
    $region29: #{tpu_custom_call.1} parent=1 // pred_fallthru
      _
    %223 = vsyncpa [#allocation3], 1
    %224 = vsyncpa [#allocation6], 1
    %225 = vsyncpa [#allocation4], 1

// kernel: tpu_custom_call.1
$region0: #{tpu_custom_call.1}
  #allocation0 [shape = 'u32[]', space=smem, size = 0x4, offset = 0x4, fixed_abs, tag = 'smem constant byte address 0x4 - core index']
  #allocation1 [shape = 'u32[72,128]{1,0:T(1,128)}', space=vmem, size = 0x9000, scoped, tag = 'internal scratch']
  %s0 = inlined_call_operand.hbm [shape: f32[8,256], index: 0, kind: input, shape index: {}]
  %s1 = inlined_call_operand.hbm [shape: bf16[256,128], index: 1, kind: input, shape index: {}]
  %s2 = inlined_call_operand.vmem [shape: f32[1,128], index: 2, kind: input, shape index: {}]
  %s3 = inlined_call_operand.hbm [shape: f32[8,128], index: 3, kind: output, shape index: {}]
  %s4 = sld [smem:[#allocation0]]
  $region30: #{tpu_custom_call.1} parent=0
    _
  %s6 = ssub.s32 1, %s4
  %s7 = scalar_select 0, %s6, %s4
  $region1: #{tpu_custom_call.1} parent=0
    #allocation2 [shape = 'u8[8192]{0}', space=vmem, size = 0x2000, scoped, tag = 'input window, operand 0, single buffered']
    #allocation3 [shape = 's32[1]{0}', space=sflag, size = 0x4, scoped, tag = 'scoped memory for tpu_custom_call.1']
    #allocation4 [shape = 's32[1]{0}', space=sflag, size = 0x4, scoped, tag = 'scoped memory for tpu_custom_call.1']
    #allocation5 [shape = 'u8[65536]{0}', space=vmem, size = 0x10000, scoped, tag = 'input window, operand 1, single buffered']
    #allocation6 [shape = 's32[1]{0}', space=sflag, size = 0x4, scoped, tag = 'scoped memory for tpu_custom_call.1']
    #allocation7 [shape = 'u8[4096]{0}', space=vmem, size = 0x1000, scoped, tag = 'output window, operand 0, single buffered']
    %8 = vsyncpa [#allocation3], 0
    %9 = vsyncpa [#allocation6], 0
    %10 = vsyncpa [#allocation4], 0
    // Predicated region
    $region2: #{tpu_custom_call.1} parent=1 // pred_check
      _
    $region3: #{tpu_custom_call.1} parent=1 // pred_check_branch
      %12 = sbr.rel (0) target = $region5
    $region4: #{tpu_custom_call.1} parent=1 // pred_region
      %14 = vsyncadd [#allocation3], 0
      %s16 = sshll.u32 %s0, 4
      %s17 = int_to_ptr.hbm [resolvable:$true] %s16
      %s18 = sshll.u32 [#allocation2], 4
      %s19 = int_to_ptr.vmem [resolvable:$true] %s18
      %21 = dma.hbm_to_vmem [thread:$0]  %s17, 256, %s19, [#allocation3]
    $region5: #{tpu_custom_call.1} parent=1 // pred_fallthru
      _
    // Predicated region
    $region6: #{tpu_custom_call.1} parent=1 // pred_check
      _
    $region7: #{tpu_custom_call.1} parent=1 // pred_check_branch
      %23 = sbr.rel (0) target = $region9
    $region8: #{tpu_custom_call.1} parent=1 // pred_region
      %25 = vsyncadd [#allocation6], 0
      %s26 = sshll.u32 %s1, 4
      %s27 = int_to_ptr.hbm [resolvable:$true] %s26
      %s28 = sshll.u32 [#allocation5], 4
      %s29 = int_to_ptr.vmem [resolvable:$true] %s28
      %34 = dma.hbm_to_vmem [thread:$0]  %s27, 2048, %s29, [#allocation6], 64, 64, 4
    $region9: #{tpu_custom_call.1} parent=1 // pred_fallthru
      _
    // Predicated region
    $region10: #{tpu_custom_call.1} parent=1 // pred_check
      _
    $region11: #{tpu_custom_call.1} parent=1 // pred_check_branch
      %36 = sbr.rel (0) target = $region13
    $region12: #{tpu_custom_call.1} parent=1 // pred_region
      _
    $region13: #{tpu_custom_call.1} parent=1 // pred_fallthru
      _
    // Predicated region
    $region14: #{tpu_custom_call.1} parent=1 // pred_check
      _
    $region15: #{tpu_custom_call.1} parent=1 // pred_check_branch
      %38 = sbr.rel (0) target = $region17
    $region16: #{tpu_custom_call.1} parent=1 // pred_region
      %40 = dma.done [#allocation3], 256
    $region17: #{tpu_custom_call.1} parent=1 // pred_fallthru
      _
    // Predicated region
    $region18: #{tpu_custom_call.1} parent=1 // pred_check
      _
    $region19: #{tpu_custom_call.1} parent=1 // pred_check_branch
      %42 = sbr.rel (0) target = $region21
    $region20: #{tpu_custom_call.1} parent=1 // pred_region
      %44 = dma.done [#allocation6], 2048
    $region21: #{tpu_custom_call.1} parent=1 // pred_fallthru
      _
    %v45 = vld [vmem:[#allocation2] sm:$0xff]
    %v46 = vld [vmem:[#allocation2 + $0x8] sm:$0xff]
    %v47 = vpack.c.bf16 %v45, %v45
    %v48 = vpack.c.bf16 %v46, %v46
    %v49 = vld [vmem:[#allocation5] sm:$0xf]
    %v50 = vld [vmem:[#allocation5 + $0x4] sm:$0xf]
    %v51 = vld [vmem:[#allocation5 + $0x8] sm:$0xf]
    %v52 = vld [vmem:[#allocation5 + $0xc] sm:$0xf]
    %v53 = vld [vmem:[#allocation5 + $0x10] sm:$0xf]
    %v54 = vld [vmem:[#allocation5 + $0x14] sm:$0xf]
    %v55 = vld [vmem:[#allocation5 + $0x18] sm:$0xf]
    %v56 = vld [vmem:[#allocation5 + $0x1c] sm:$0xf]
    %v57 = vld [vmem:[#allocation5 + $0x20] sm:$0xf]
    %v58 = vld [vmem:[#allocation5 + $0x24] sm:$0xf]
    %v59 = vld [vmem:[#allocation5 + $0x28] sm:$0xf]
    %v60 = vld [vmem:[#allocation5 + $0x2c] sm:$0xf]
    %v61 = vld [vmem:[#allocation5 + $0x30] sm:$0xf]
    %v62 = vld [vmem:[#allocation5 + $0x34] sm:$0xf]
    %v63 = vld [vmem:[#allocation5 + $0x38] sm:$0xf]
    %v64 = vld [vmem:[#allocation5 + $0x3c] sm:$0xf]
    %v65 = vld [vmem:[#allocation5 + $0x40] sm:$0xf]
    %v66 = vld [vmem:[#allocation5 + $0x44] sm:$0xf]
    %v67 = vld [vmem:[#allocation5 + $0x48] sm:$0xf]
    %v68 = vld [vmem:[#allocation5 + $0x4c] sm:$0xf]
    %v69 = vld [vmem:[#allocation5 + $0x50] sm:$0xf]
    %v70 = vld [vmem:[#allocation5 + $0x54] sm:$0xf]
    %v71 = vld [vmem:[#allocation5 + $0x58] sm:$0xf]
    %v72 = vld [vmem:[#allocation5 + $0x5c] sm:$0xf]
    %v73 = vld [vmem:[#allocation5 + $0x60] sm:$0xf]
    %v74 = vld [vmem:[#allocation5 + $0x64] sm:$0xf]
    %v75 = vld [vmem:[#allocation5 + $0x68] sm:$0xf]
    %v76 = vld [vmem:[#allocation5 + $0x6c] sm:$0xf]
    %v77 = vld [vmem:[#allocation5 + $0x70] sm:$0xf]
    %v78 = vld [vmem:[#allocation5 + $0x74] sm:$0xf]
    %v79 = vld [vmem:[#allocation5 + $0x78] sm:$0xf]
    %v80 = vld [vmem:[#allocation5 + $0x7c] sm:$0xf]
    %v81 = vld [vmem:[%s2] sm:$0x1]
    %v83 = vperm.slane %v81, 0
    %v117 = vunpack.c.l.b16 %v49
    %v118 = vunpack.c.l.b16 %v50
    %v119 = vunpack.c.l.b16 %v51
    %v120 = vunpack.c.l.b16 %v52
    %v121 = vunpack.c.l.b16 %v53
    %v122 = vunpack.c.l.b16 %v54
    %v123 = vunpack.c.l.b16 %v55
    %v124 = vunpack.c.l.b16 %v56
    %v125 = vunpack.c.l.b16 %v57
    %v126 = vunpack.c.l.b16 %v58
    %v127 = vunpack.c.l.b16 %v59
    %v128 = vunpack.c.l.b16 %v60
    %v129 = vunpack.c.l.b16 %v61
    %v130 = vunpack.c.l.b16 %v62
    %v131 = vunpack.c.l.b16 %v63
    %v132 = vunpack.c.l.b16 %v64
    %v133 = vunpack.c.l.b16 %v65
    %v134 = vunpack.c.l.b16 %v66
    %v135 = vunpack.c.l.b16 %v67
    %v136 = vunpack.c.l.b16 %v68
    %v137 = vunpack.c.l.b16 %v69
    %v138 = vunpack.c.l.b16 %v70
    %v139 = vunpack.c.l.b16 %v71
    %v140 = vunpack.c.l.b16 %v72
    %v141 = vunpack.c.l.b16 %v73
    %v142 = vunpack.c.l.b16 %v74
    %v143 = vunpack.c.l.b16 %v75
    %v144 = vunpack.c.l.b16 %v76
    %v145 = vunpack.c.l.b16 %v77
    %v146 = vunpack.c.l.b16 %v78
    %v147 = vunpack.c.l.b16 %v79
    %v148 = vunpack.c.l.b16 %v80
    %v149 = vpack.c.b16 %v118, %v117
    %v150 = vpack.c.b16 %v120, %v119
    %v151 = vpack.c.b16 %v122, %v121
    %v152 = vpack.c.b16 %v124, %v123
    %v153 = vpack.c.b16 %v126, %v125
    %v154 = vpack.c.b16 %v128, %v127
    %v155 = vpack.c.b16 %v130, %v129
    %v156 = vpack.c.b16 %v132, %v131
    %v157 = vpack.c.b16 %v134, %v133
    %v158 = vpack.c.b16 %v136, %v135
    %v159 = vpack.c.b16 %v138, %v137
    %v160 = vpack.c.b16 %v140, %v139
    %v161 = vpack.c.b16 %v142, %v141
    %v162 = vpack.c.b16 %v144, %v143
    %v163 = vpack.c.b16 %v146, %v145
    %v164 = vpack.c.b16 %v148, %v147
    %181 = vmatpush.bf16.msra.mxu0 %v156
    %182 = vmatpush.bf16.msra.mxu0 %v155
    %183 = vmatpush.bf16.msra.mxu0 %v154
    %184 = vmatpush.bf16.msra.mxu0 %v153
    %185 = vmatpush.bf16.msra.mxu0 %v152
    %186 = vmatpush.bf16.msra.mxu0 %v151
    %187 = vmatpush.bf16.msra.mxu0 %v150
    %188 = vmatpush.bf16.msra.mxu0 %v149
    %189 = vmatmul.bf16.gmra.mxu0 %v47
    %v190 = vpop.f32.mrf.mxu0
    %v191 = vadd.f32 %v83, %v190
    %v192 = vpop.f32.mrf.mxu0
    %193 = vdwg.mxu0
    %194 = vmatpush.bf16.msra.mxu0 %v164
    %195 = vmatpush.bf16.msra.mxu0 %v163
    %196 = vmatpush.bf16.msra.mxu0 %v162
    %197 = vmatpush.bf16.msra.mxu0 %v161
    %198 = vmatpush.bf16.msra.mxu0 %v160
    %199 = vmatpush.bf16.msra.mxu0 %v159
    %200 = vmatpush.bf16.msra.mxu0 %v158
    %201 = vmatpush.bf16.msra.mxu0 %v157
    %202 = vmatmul.bf16.gmra.mxu0 %v48
    %v203 = vpop.f32.mrf.mxu0
    %v204 = vadd.f32 %v191, %v203
    %v205 = vpop.f32.mrf.mxu0
    %206 = vdwg.mxu0
    %207 = vst [vmem:[#allocation7] sm:$0xff] %v204
    // Predicated region
    $region22: #{tpu_custom_call.1} parent=1 // pred_check
      _
    $region23: #{tpu_custom_call.1} parent=1 // pred_check_branch
      %209 = sbr.rel (0) target = $region25
    $region24: #{tpu_custom_call.1} parent=1 // pred_region
      %211 = vsyncadd [#allocation4], 0
      %s213 = sshll.u32 [#allocation7], 4
      %s214 = int_to_ptr.vmem [resolvable:$true] %s213
      %s215 = sshll.u32 %s3, 4
      %s216 = int_to_ptr.hbm [resolvable:$true] %s215
      %218 = dma.vmem_to_hbm [thread:$0]  %s214, 128, %s216, [#allocation4]
    $region25: #{tpu_custom_call.1} parent=1 // pred_fallthru
      _
    // Predicated region
    $region26: #{tpu_custom_call.1} parent=1 // pred_check
      _
    $region27: #{tpu_custom_call.1} parent=1 // pred_check_branch
      %220 = sbr.rel (0) target = $region29
    $region28: #{tpu_custom_call.1} parent=1 // pred_region
      %222 = dma.done [#allocation4], 128
    $region29: #{tpu_custom_call.1} parent=1 // pred_fallthru
      _
    %223 = vsyncpa [#allocation3], 1
    %224 = vsyncpa [#allocation6], 1
    %225 = vsyncpa [#allocation4], 1

</llo_original>
